<compile_context>
chip_gen: v7x
topology: tpu7x:2x2x1
jax: 0.10.0
libtpu: 0.0.40
codegen_flags: <defaults>
</compile_context>

<pallas_src>
import functools

import jax
import jax.numpy as jnp
from jax.experimental import pallas as pl
from jax.experimental.pallas import tpu as pltpu


def _sparsemap_marg_kernel(collect_logs,
                           x_ref, wsk_ref, we_ref, weff_ref, beff_ref, sel_ref,
                           y_ref, *out_refs):
    if collect_logs:
        loss_ref, ent_ref, probs_ref, lc_ref, dec_ref = out_refs
    else:
        loss_ref, ent_ref = out_refs

    xb = x_ref[...].astype(jnp.bfloat16)                          # [TB, D_IN]

    # ---- encoder: support scores via pre-folded W_sk = w_enc @ configs^T ----
    s = jnp.dot(xb, wsk_ref[...], preferred_element_type=jnp.float32)  # [TB, K]
    s = s - jnp.max(s, axis=-1, keepdims=True)
    e = jnp.exp(s)
    p = e * pl.reciprocal(jnp.sum(e, axis=-1, keepdims=True), approx=True)
    # TODO(synk): true SparseMAP solves an active-set QP; a dense softmax over
    # the enumerated bit-vector support stands in for it here.

    ent_ref[...] = -jnp.sum(p * jnp.log(p + 1e-20), axis=-1, keepdims=True)

    # ---- bit-vector support + deterministic decoder, folded to one matmul ---
    # z[b,k,:] = XOR(base[b,:], cfg[k,:]) = base + cfg - 2*base*cfg, therefore
    # dec[b,(k,o)] = base[b,:] @ W_eff[:, (k,o)] + b_eff[(k,o)]
    scores = jnp.dot(xb, we_ref[...], preferred_element_type=jnp.float32)   # [TB, NBITS]
    base = (scores > 0.0).astype(jnp.bfloat16)                              # [TB, NBITS]
    dec = jnp.dot(base, weff_ref[...],
                  preferred_element_type=jnp.float32) + beff_ref[...]       # [TB, K*D_OUT]

    # ---- per-support MSE loss components vs labels[idxs] --------------------
    y = y_ref[...]                                                          # [TB, D_OUT]
    reps = dec.shape[-1] // y.shape[-1]                                     # = K (static)
    diff = dec - jnp.tile(y, (1, reps))                                     # [TB, K*D_OUT]
    # blocked lane-sum via a 0/1 selector matmul (runs on the MXU, no reshape)
    lc = jnp.dot(diff * diff, sel_ref[...],
                 preferred_element_type=jnp.float32)                        # [TB, K]

    # ---- per-row weighted loss; scalar reduction finishes in the wrapper ----
    loss_ref[...] = jnp.sum(p * lc, axis=-1, keepdims=True)                 # [TB, 1]

    if collect_logs:
        probs_ref[...] = p
        lc_ref[...] = lc
        dec_ref[...] = dec


def _choose_batch_tile(B, per_row_bytes, requested=None, budget_bytes=24 << 20):
    """Largest multiple-of-8 divisor of B under the (v7x-safe) VMEM budget."""
    cap = requested if requested is not None else max(8, budget_bytes // max(per_row_bytes, 1))
    cap = min(int(cap), B)
    tb = (cap // 8) * 8
    while tb >= 8:
        if B % tb == 0:
            return tb
        tb -= 8
    return B


def sparsemap_marg_forward(encoder_input, labels, w_enc, configs, w_dec, b_dec,
                           encoder_entropy_coeff=0.1, batch_tile=None,
                           collect_logs=True):
    x = encoder_input.astype(jnp.float32)
    labels = labels.astype(jnp.float32)
    B, D_IN = x.shape
    K, NBITS = configs.shape
    D_OUT = w_dec.shape[-1]
    KD = K * D_OUT

    # ---- weight-only folding (done once, outside the kernel) ----------------
    cfg = configs.astype(jnp.float32)
    w_sk = jnp.dot(w_enc, cfg.T).astype(jnp.bfloat16)                     # [D_IN, K]
    w_enc_b = w_enc.astype(jnp.bfloat16)                                  # [D_IN, NBITS]
    w_eff = (w_dec[:, None, :] * (1.0 - 2.0 * cfg.T[:, :, None])
             ).reshape(NBITS, KD).astype(jnp.bfloat16)                    # [NBITS, K*D_OUT]
    b_eff = (jnp.dot(cfg, w_dec) + b_dec.reshape(1, D_OUT)
             ).reshape(1, KD).astype(jnp.float32)                         # [1, K*D_OUT]
    sel = jnp.repeat(jnp.eye(K, dtype=jnp.float32), D_OUT, axis=0)        # [K*D_OUT, K]

    # ---- batch tiling / grid -------------------------------------------------
    per_row_bytes = 4 * (D_IN + D_OUT + 2 * K + 2 + 6 * KD)   # io + live intermediates
    TB = _choose_batch_tile(B, per_row_bytes, requested=batch_tile)
    grid = (B // TB,)

    in_specs = [
        pl.BlockSpec((TB, D_IN), lambda i: (i, 0)),       # x (batch-tiled)
        pl.BlockSpec((D_IN, K), lambda i: (0, 0)),        # W_sk (resident)
        pl.BlockSpec((D_IN, NBITS), lambda i: (0, 0)),    # w_enc (resident)
        pl.BlockSpec((NBITS, KD), lambda i: (0, 0)),      # W_eff (resident)
        pl.BlockSpec((1, KD), lambda i: (0, 0)),          # b_eff (resident)
        pl.BlockSpec((KD, K), lambda i: (0, 0)),          # selector (resident)
        pl.BlockSpec((TB, D_OUT), lambda i: (i, 0)),      # labels (batch-tiled)
    ]
    out_shapes = [
        jax.ShapeDtypeStruct((B, 1), jnp.float32),        # per-row weighted loss
        jax.ShapeDtypeStruct((B, 1), jnp.float32),        # per-row entropy
    ]
    out_specs = [
        pl.BlockSpec((TB, 1), lambda i: (i, 0)),
        pl.BlockSpec((TB, 1), lambda i: (i, 0)),
    ]
    if collect_logs:
        out_shapes += [
            jax.ShapeDtypeStruct((B, K), jnp.float32),    # encoder_probs
            jax.ShapeDtypeStruct((B, K), jnp.float32),    # loss_components
            jax.ShapeDtypeStruct((B, KD), jnp.float32),   # decoder_output (lane-dense)
        ]
        out_specs += [
            pl.BlockSpec((TB, K), lambda i: (i, 0)),
            pl.BlockSpec((TB, K), lambda i: (i, 0)),
            pl.BlockSpec((TB, KD), lambda i: (i, 0)),
        ]

    weight_bytes = 2 * (D_IN * K + D_IN * NBITS + NBITS * KD) + 4 * (KD + KD * K)
    vmem_limit = int(min(max(weight_bytes + 2 * TB * per_row_bytes + (4 << 20),
                             16 << 20), 48 << 20))

    flops = (2 * B * D_IN * K + 2 * B * D_IN * NBITS + 2 * B * NBITS * KD
             + 2 * B * KD * K + 10 * B * KD)
    bytes_in = 4 * B * (D_IN + D_OUT) + weight_bytes
    bytes_out = 4 * (2 * B + (2 * B * K + B * KD if collect_logs else 0))
    cost = pl.CostEstimate(flops=int(flops), transcendentals=int(2 * B * K),
                           bytes_accessed=int(bytes_in + bytes_out))

    outs = pl.pallas_call(
        functools.partial(_sparsemap_marg_kernel, collect_logs),
        out_shape=tuple(out_shapes),
        grid_spec=pltpu.PrefetchScalarGridSpec(
            num_scalar_prefetch=0, grid=grid,
            in_specs=in_specs, out_specs=tuple(out_specs)),
        compiler_params=pltpu.CompilerParams(
            dimension_semantics=("parallel",),
            vmem_limit_bytes=vmem_limit),
        cost_estimate=cost,
    )(x, w_sk, w_enc_b, w_eff, b_eff, sel, labels)

    loss_rows, ent_rows = outs[0], outs[1]
    loss = jnp.sum(loss_rows) / B                       # encoder_probs @ loss_components / B
    encoder_entropy = jnp.sum(ent_rows) / B
    full_loss = loss - encoder_entropy_coeff * encoder_entropy

    logs = {
        'loss': loss,
        'encoder_entropy': encoder_entropy,
        'support': jnp.full((B,), float(K), dtype=jnp.float32),
    }
    if collect_logs:
        probs, lc, dec_flat = outs[2], outs[3], outs[4]
        idxs = jnp.repeat(jnp.arange(B, dtype=jnp.int32), K)
        logs.update({
            'distr': probs.reshape(-1),
            'loss_output': lc.reshape(-1),
            'idxs': idxs,
            'decoder_output': dec_flat.reshape(B * K, D_OUT),
        })
    return {'loss': full_loss, 'log': logs}


if __name__ == "__main__":
    # small demo shapes: encoder_input is e.g. a flattened [B, 2, 4, 4] image
    B, D_IN, NBITS, K, D_OUT = 32, 32, 8, 16, 32

    key = jax.random.PRNGKey(0)
    k1, k2, k3, k4, k5 = jax.random.split(key, 5)
    x = jax.random.normal(k1, (B, D_IN), dtype=jnp.float32)
    labels = jax.random.normal(k2, (B, D_OUT), dtype=jnp.float32)

    # deterministic "module parameters"
    w_enc = 0.1 * jax.random.normal(k3, (D_IN, NBITS), dtype=jnp.float32)
    w_dec = 0.1 * jax.random.normal(k4, (NBITS, D_OUT), dtype=jnp.float32)
    b_dec = 0.01 * jax.random.normal(k5, (1, D_OUT), dtype=jnp.float32)

    # fixed enumeration of K bit-vector configurations (support skeleton)
    ks = jnp.arange(K, dtype=jnp.int32)[:, None]
    js = jnp.arange(NBITS, dtype=jnp.int32)[None, :]
    configs = ((ks >> js) & 1).astype(jnp.float32)              # [K, NBITS]

    out = sparsemap_marg_forward(x, labels, w_enc, configs, w_dec, b_dec,
                                 encoder_entropy_coeff=0.1, batch_tile=8,
                                 collect_logs=True)
    jax.block_until_ready(out)
    print("KERNEL_OK")
</pallas_src>

<mosaic_0001>
module attributes {stable_mosaic.version = 11 : i64} {
  func.func @_sparsemap_marg_kernel(%arg0: i32, %arg1: memref<8x32xf32, #tpu.memory_space<vmem>>, %arg2: memref<32x16xbf16, #tpu.memory_space<vmem>>, %arg3: memref<32x8xbf16, #tpu.memory_space<vmem>>, %arg4: memref<8x512xbf16, #tpu.memory_space<vmem>>, %arg5: memref<1x512xf32, #tpu.memory_space<vmem>>, %arg6: memref<512x16xf32, #tpu.memory_space<vmem>>, %arg7: memref<8x32xf32, #tpu.memory_space<vmem>>, %arg8: memref<8x1xf32, #tpu.memory_space<vmem>>, %arg9: memref<8x1xf32, #tpu.memory_space<vmem>>, %arg10: memref<8x16xf32, #tpu.memory_space<vmem>>, %arg11: memref<8x16xf32, #tpu.memory_space<vmem>>, %arg12: memref<8x512xf32, #tpu.memory_space<vmem>>) attributes {dimension_semantics = [#tpu.dimension_semantics<parallel>], iteration_bounds = array<i64: 4>, scalar_prefetch = 0 : i64, scratch_operands = 0 : i64, tpu.core_type = #tpu.core_type<tc>, window_params = [{transform_indices = @transform_0, window_bounds = array<i64: 8, 32>}, {pipeline_mode = #tpu.pipeline_mode<synchronous>, transform_indices = @transform_1, window_bounds = array<i64: 32, 16>}, {pipeline_mode = #tpu.pipeline_mode<synchronous>, transform_indices = @transform_2, window_bounds = array<i64: 32, 8>}, {pipeline_mode = #tpu.pipeline_mode<synchronous>, transform_indices = @transform_3, window_bounds = array<i64: 8, 512>}, {pipeline_mode = #tpu.pipeline_mode<synchronous>, transform_indices = @transform_4, window_bounds = array<i64: 1, 512>}, {pipeline_mode = #tpu.pipeline_mode<synchronous>, transform_indices = @transform_5, window_bounds = array<i64: 512, 16>}, {transform_indices = @transform_6, window_bounds = array<i64: 8, 32>}, {transform_indices = @transform_7, window_bounds = array<i64: 8, 1>}, {transform_indices = @transform_8, window_bounds = array<i64: 8, 1>}, {transform_indices = @transform_9, window_bounds = array<i64: 8, 16>}, {transform_indices = @transform_10, window_bounds = array<i64: 8, 16>}, {transform_indices = @transform_11, window_bounds = array<i64: 8, 512>}]} {
    %c0 = arith.constant 0 : index
    %c0_0 = arith.constant 0 : index
    %0 = vector.load %arg1[%c0, %c0_0] : memref<8x32xf32, #tpu.memory_space<vmem>>, vector<8x32xf32>
    %1 = arith.truncf %0 : vector<8x32xf32> to vector<8x32xbf16>
    %c0_1 = arith.constant 0 : index
    %c0_2 = arith.constant 0 : index
    %2 = vector.load %arg2[%c0_1, %c0_2] : memref<32x16xbf16, #tpu.memory_space<vmem>>, vector<32x16xbf16>
    %cst = arith.constant dense<0.000000e+00> : vector<8x16xf32>
    %3 = tpu.matmul %1, %2, %cst {dimension_numbers = #tpu.dot_dimension_numbers<[1], [0], [0], [1], [0, 0, 1, 1], [], []>} : vector<8x32xbf16>, vector<32x16xbf16>, vector<8x16xf32> -> vector<8x16xf32>
    %cst_3 = arith.constant dense<0xFF800000> : vector<8xf32>
    %4 = vector.multi_reduction <maximumf>, %3, %cst_3 [1] : vector<8x16xf32> to vector<8xf32>
    %5 = vector.shape_cast %4 : vector<8xf32> to vector<8x1xf32>
    %6 = vector.broadcast %5 : vector<8x1xf32> to vector<8x16xf32>
    %7 = arith.subf %3, %6 : vector<8x16xf32>
    %8 = math.exp %7 : vector<8x16xf32>
    %cst_4 = arith.constant dense<0.000000e+00> : vector<8xf32>
    %9 = vector.multi_reduction <add>, %8, %cst_4 [1] : vector<8x16xf32> to vector<8xf32>
    %10 = vector.shape_cast %9 : vector<8xf32> to vector<8x1xf32>
    %11 = tpu.reciprocal %10 {approx = true} : vector<8x1xf32> -> vector<8x1xf32>
    %12 = vector.broadcast %11 : vector<8x1xf32> to vector<8x16xf32>
    %13 = arith.mulf %8, %12 : vector<8x16xf32>
    %cst_5 = arith.constant 9.99999968E-21 : f32
    %14 = vector.broadcast %cst_5 : f32 to vector<8x16xf32>
    %15 = arith.addf %13, %14 : vector<8x16xf32>
    %16 = math.log %15 : vector<8x16xf32>
    %17 = arith.mulf %13, %16 : vector<8x16xf32>
    %cst_6 = arith.constant dense<0.000000e+00> : vector<8xf32>
    %18 = vector.multi_reduction <add>, %17, %cst_6 [1] : vector<8x16xf32> to vector<8xf32>
    %19 = vector.shape_cast %18 : vector<8xf32> to vector<8x1xf32>
    %cst_7 = arith.constant 0.000000e+00 : f32
    %20 = vector.broadcast %cst_7 : f32 to vector<8x1xf32>
    %21 = arith.subf %20, %19 : vector<8x1xf32>
    %c0_8 = arith.constant 0 : index
    %c0_9 = arith.constant 0 : index
    %22 = vector.load %arg9[%c0_8, %c0_9] : memref<8x1xf32, #tpu.memory_space<vmem>>, vector<8x1xf32>
    tpu.vector_store %arg9[%c0_8, %c0_9], %21 {strides = array<i32>} : memref<8x1xf32, #tpu.memory_space<vmem>>, vector<8x1xf32>,
    %c0_10 = arith.constant 0 : index
    %c0_11 = arith.constant 0 : index
    %23 = vector.load %arg3[%c0_10, %c0_11] : memref<32x8xbf16, #tpu.memory_space<vmem>>, vector<32x8xbf16>
    %cst_12 = arith.constant dense<0.000000e+00> : vector<8x8xf32>
    %24 = tpu.matmul %1, %23, %cst_12 {dimension_numbers = #tpu.dot_dimension_numbers<[1], [0], [0], [1], [0, 0, 1, 1], [], []>} : vector<8x32xbf16>, vector<32x8xbf16>, vector<8x8xf32> -> vector<8x8xf32>
    %cst_13 = arith.constant 0.000000e+00 : f32
    %25 = vector.broadcast %cst_13 : f32 to vector<8x8xf32>
    %26 = arith.cmpf ogt, %24, %25 : vector<8x8xf32>
    %27 = arith.extui %26 : vector<8x8xi1> to vector<8x8xi32>
    %28 = arith.sitofp %27 : vector<8x8xi32> to vector<8x8xf32>
    %29 = arith.truncf %28 : vector<8x8xf32> to vector<8x8xbf16>
    %c0_14 = arith.constant 0 : index
    %c0_15 = arith.constant 0 : index
    %30 = vector.load %arg4[%c0_14, %c0_15] : memref<8x512xbf16, #tpu.memory_space<vmem>>, vector<8x512xbf16>
    %cst_16 = arith.constant dense<0.000000e+00> : vector<8x512xf32>
    %31 = tpu.matmul %29, %30, %cst_16 {dimension_numbers = #tpu.dot_dimension_numbers<[1], [0], [0], [1], [0, 0, 1, 1], [], []>} : vector<8x8xbf16>, vector<8x512xbf16>, vector<8x512xf32> -> vector<8x512xf32>
    %c0_17 = arith.constant 0 : index
    %c0_18 = arith.constant 0 : index
    %32 = vector.load %arg5[%c0_17, %c0_18] : memref<1x512xf32, #tpu.memory_space<vmem>>, vector<1x512xf32>
    %33 = vector.broadcast %32 : vector<1x512xf32> to vector<8x512xf32>
    %34 = arith.addf %31, %33 : vector<8x512xf32>
    %c0_19 = arith.constant 0 : index
    %c0_20 = arith.constant 0 : index
    %35 = vector.load %arg7[%c0_19, %c0_20] : memref<8x32xf32, #tpu.memory_space<vmem>>, vector<8x32xf32>
    %36 = tpu.concatenate %35, %35, %35, %35, %35, %35, %35, %35, %35, %35, %35, %35, %35, %35, %35, %35 in 1 : vector<8x32xf32>, vector<8x32xf32>, vector<8x32xf32>, vector<8x32xf32>, vector<8x32xf32>, vector<8x32xf32>, vector<8x32xf32>, vector<8x32xf32>, vector<8x32xf32>, vector<8x32xf32>, vector<8x32xf32>, vector<8x32xf32>, vector<8x32xf32>, vector<8x32xf32>, vector<8x32xf32>, vector<8x32xf32> -> vector<8x512xf32>
    %37 = arith.subf %34, %36 : vector<8x512xf32>
    %38 = arith.mulf %37, %37 : vector<8x512xf32>
    %c0_21 = arith.constant 0 : index
    %c0_22 = arith.constant 0 : index
    %39 = vector.load %arg6[%c0_21, %c0_22] : memref<512x16xf32, #tpu.memory_space<vmem>>, vector<512x16xf32>
    %cst_23 = arith.constant dense<0.000000e+00> : vector<8x16xf32>
    %40 = tpu.matmul %38, %39, %cst_23 {dimension_numbers = #tpu.dot_dimension_numbers<[1], [0], [0], [1], [0, 0, 1, 1], [], []>} : vector<8x512xf32>, vector<512x16xf32>, vector<8x16xf32> -> vector<8x16xf32>
    %41 = arith.mulf %13, %40 : vector<8x16xf32>
    %cst_24 = arith.constant dense<0.000000e+00> : vector<8xf32>
    %42 = vector.multi_reduction <add>, %41, %cst_24 [1] : vector<8x16xf32> to vector<8xf32>
    %43 = vector.shape_cast %42 : vector<8xf32> to vector<8x1xf32>
    %c0_25 = arith.constant 0 : index
    %c0_26 = arith.constant 0 : index
    %44 = vector.load %arg8[%c0_25, %c0_26] : memref<8x1xf32, #tpu.memory_space<vmem>>, vector<8x1xf32>
    tpu.vector_store %arg8[%c0_25, %c0_26], %43 {strides = array<i32>} : memref<8x1xf32, #tpu.memory_space<vmem>>, vector<8x1xf32>,
    %c0_27 = arith.constant 0 : index
    %c0_28 = arith.constant 0 : index
    %45 = vector.load %arg10[%c0_27, %c0_28] : memref<8x16xf32, #tpu.memory_space<vmem>>, vector<8x16xf32>
    tpu.vector_store %arg10[%c0_27, %c0_28], %13 {strides = array<i32>} : memref<8x16xf32, #tpu.memory_space<vmem>>, vector<8x16xf32>,
    %c0_29 = arith.constant 0 : index
    %c0_30 = arith.constant 0 : index
    %46 = vector.load %arg11[%c0_29, %c0_30] : memref<8x16xf32, #tpu.memory_space<vmem>>, vector<8x16xf32>
    tpu.vector_store %arg11[%c0_29, %c0_30], %40 {strides = array<i32>} : memref<8x16xf32, #tpu.memory_space<vmem>>, vector<8x16xf32>,
    %c0_31 = arith.constant 0 : index
    %c0_32 = arith.constant 0 : index
    %47 = vector.load %arg12[%c0_31, %c0_32] : memref<8x512xf32, #tpu.memory_space<vmem>>, vector<8x512xf32>
    tpu.vector_store %arg12[%c0_31, %c0_32], %34 {strides = array<i32>} : memref<8x512xf32, #tpu.memory_space<vmem>>, vector<8x512xf32>,
    return
  }
  func.func @transform_0(%arg0: i32) -> (i32, i32) {
    %c0_i32 = arith.constant 0 : i32
    %c0_i32_0 = arith.constant 0 : i32
    return %arg0, %c0_i32 : i32, i32
  }
  func.func @transform_1(%arg0: i32) -> (i32, i32) {
    %c0_i32 = arith.constant 0 : i32
    %c0_i32_0 = arith.constant 0 : i32
    %c0_i32_1 = arith.constant 0 : i32
    return %c0_i32, %c0_i32_0 : i32, i32
  }
  func.func @transform_2(%arg0: i32) -> (i32, i32) {
    %c0_i32 = arith.constant 0 : i32
    %c0_i32_0 = arith.constant 0 : i32
    %c0_i32_1 = arith.constant 0 : i32
    return %c0_i32, %c0_i32_0 : i32, i32
  }
  func.func @transform_3(%arg0: i32) -> (i32, i32) {
    %c0_i32 = arith.constant 0 : i32
    %c0_i32_0 = arith.constant 0 : i32
    %c0_i32_1 = arith.constant 0 : i32
    return %c0_i32, %c0_i32_0 : i32, i32
  }
  func.func @transform_4(%arg0: i32) -> (i32, i32) {
    %c0_i32 = arith.constant 0 : i32
    %c0_i32_0 = arith.constant 0 : i32
    %c0_i32_1 = arith.constant 0 : i32
    return %c0_i32, %c0_i32_0 : i32, i32
  }
  func.func @transform_5(%arg0: i32) -> (i32, i32) {
    %c0_i32 = arith.constant 0 : i32
    %c0_i32_0 = arith.constant 0 : i32
    %c0_i32_1 = arith.constant 0 : i32
    return %c0_i32, %c0_i32_0 : i32, i32
  }
  func.func @transform_6(%arg0: i32) -> (i32, i32) {
    %c0_i32 = arith.constant 0 : i32
    %c0_i32_0 = arith.constant 0 : i32
    return %arg0, %c0_i32 : i32, i32
  }
  func.func @transform_7(%arg0: i32) -> (i32, i32) {
    %c0_i32 = arith.constant 0 : i32
    %c0_i32_0 = arith.constant 0 : i32
    return %arg0, %c0_i32 : i32, i32
  }
  func.func @transform_8(%arg0: i32) -> (i32, i32) {
    %c0_i32 = arith.constant 0 : i32
    %c0_i32_0 = arith.constant 0 : i32
    return %arg0, %c0_i32 : i32, i32
  }
  func.func @transform_9(%arg0: i32) -> (i32, i32) {
    %c0_i32 = arith.constant 0 : i32
    %c0_i32_0 = arith.constant 0 : i32
    return %arg0, %c0_i32 : i32, i32
  }
  func.func @transform_10(%arg0: i32) -> (i32, i32) {
    %c0_i32 = arith.constant 0 : i32
    %c0_i32_0 = arith.constant 0 : i32
    return %arg0, %c0_i32 : i32, i32
  }
  func.func @transform_11(%arg0: i32) -> (i32, i32) {
    %c0_i32 = arith.constant 0 : i32
    %c0_i32_0 = arith.constant 0 : i32
    return %arg0, %c0_i32 : i32, i32
  }
}

</mosaic_0001>

<llo_original>
// kernel: tpu_custom_call.1
$region0: #{tpu_custom_call.1}
  #allocation0 [shape = 'u32[]', space=smem, size = 0x4, offset = 0x4, fixed_abs, tag = 'smem constant byte address 0x4 - core index']
  #allocation1 [shape = 'u32[144,128]{1,0:T(1,128)}', space=vmem, size = 0x12000, scoped, tag = 'internal scratch']
  %s0 = inlined_call_operand.vmem [shape: f32[32,32], index: 0, kind: input, shape index: {}]
  %s1 = inlined_call_operand.vmem [shape: bf16[32,16], index: 1, kind: input, shape index: {}]
  %s2 = inlined_call_operand.vmem [shape: bf16[32,8], index: 2, kind: input, shape index: {}]
  %s3 = inlined_call_operand.vmem [shape: bf16[8,512], index: 3, kind: input, shape index: {}]
  %s4 = inlined_call_operand.vmem [shape: f32[1,512], index: 4, kind: input, shape index: {}]
  %s5 = inlined_call_operand.vmem [shape: f32[512,16], index: 5, kind: input, shape index: {}]
  %s6 = inlined_call_operand.vmem [shape: f32[32,32], index: 6, kind: input, shape index: {}]
  %s7 = inlined_call_operand.vmem [shape: f32[32,1], index: 7, kind: output, shape index: {0}]
  %s8 = inlined_call_operand.vmem [shape: f32[32,1], index: 8, kind: output, shape index: {1}]
  %s9 = inlined_call_operand.vmem [shape: f32[32,16], index: 9, kind: output, shape index: {2}]
  %s10 = inlined_call_operand.vmem [shape: f32[32,16], index: 10, kind: output, shape index: {3}]
  %s11 = inlined_call_operand.hbm [shape: f32[32,512], index: 11, kind: output, shape index: {4}]
  %12 = xla_tuple %s7, %s8, %s9, %s10, %s11
  %s13 = sld [smem:[#allocation0]]
  $region93: #{tpu_custom_call.1} parent=0
    _
  %s15 = ssub.s32 1, %s13
  %s16 = scalar_select 0, %s15, %s13
  $region1: #{tpu_custom_call.1} parent=0
    #allocation2 [shape = 'u8[32768]{0}', space=vmem, size = 0x8000, scoped, tag = 'output window, operand 4']
    #allocation3 [shape = 's32[2]{0}', space=sflag, size = 0x8, scoped, tag = 'scoped memory for tpu_custom_call.1']
    %17 = vsyncpa [#allocation3], 0
    %s18 = scalar_lea.sflag [#allocation3], 1
    %19 = vsyncpa %s18, 0
    loop: start=0, step=1, limit=6
    $region2: #{tpu_custom_call.1} parent=1 // loop_pre_header
      _
    $region3: #{tpu_custom_call.1} parent=1 // loop_header
      %s21 = sphi 0, %s25
      %p22 = scmp.ge.s32.totalorder %s21, 6
      %s31 = sphi 0, %s33
      %s34 = sphi 0, %s31
      %s35 = sphi 0, %s34
      %s51 = sphi 0, %s35
      %s55 = sphi 0, %s55
      %s57 = sphi 0, %s55
      %s58 = sphi 0, %s57
      %s72 = sphi 0, %s58
      %s76 = sphi 0, %s76
      %s78 = sphi 0, %s76
      %s79 = sphi 0, %s78
      %s93 = sphi 0, %s79
      %s97 = sphi 0, %s97
      %s99 = sphi 0, %s97
      %s100 = sphi 0, %s99
      %s114 = sphi 0, %s100
      %s118 = sphi 0, %s118
      %s120 = sphi 0, %s118
      %s121 = sphi 0, %s120
      %s135 = sphi 0, %s121
      %s139 = sphi 0, %s139
      %s141 = sphi 0, %s139
      %s142 = sphi 0, %s141
      %s156 = sphi 0, %s142
      %s162 = sphi 0, %s164
      %s165 = sphi 0, %s162
      %s166 = sphi 0, %s165
      %s182 = sphi 0, %s166
      %s188 = sphi 0, %s190
      %s191 = sphi 0, %s188
      %s192 = sphi 0, %s191
      %s208 = sphi 0, %s192
      %s214 = sphi 0, %s216
      %s217 = sphi 0, %s214
      %s218 = sphi 0, %s217
      %s234 = sphi 0, %s218
      %s240 = sphi 0, %s242
      %s243 = sphi 0, %s240
      %s244 = sphi 0, %s243
      %s260 = sphi 0, %s244
      %s266 = sphi 0, %s268
      %s269 = sphi 0, %s266
      %s270 = sphi 0, %s269
      %s286 = sphi 0, %s270
      %s292 = sphi 0, %s294
      %s295 = sphi 0, %s292
      %s296 = sphi 0, %s295
      %s312 = sphi 0, %s296
    $region4: #{tpu_custom_call.1} parent=1 // loop_header_branch
      %24 = sbr.rel (%p22) target = $region8
    $region5: #{tpu_custom_call.1} parent=1 // loop_body
      %s26 = ssub.s32 %s21, 1
      %s27 = ssub.s32 %s21, 2
      %s28 = sadd.s32 %s21, 1
      %s29 = ssub.s32 %s21, %s28
      %p30 = scmp.eq.s32.totalorder %s29, 0
      %s32 = sadd.s32 %s31, 1
      %s33 = scalar_select %p30, %s31, %s32
      %p36 = pneg %p30
      %p37 = scmp.eq.s32.totalorder %s21, 3
      %p38 = por %p36, %p37
      %p39 = scmp.ne.s32.totalorder %s31, %s34
      %p40 = scmp.eq.s32.totalorder %s21, 0
      %p41 = por %p39, %p40
      %p42 = scmp.ne.s32.totalorder %s31, %s34
      %p43 = scmp.eq.s32.totalorder %s26, 3
      %p44 = por %p42, %p43
      %p45 = scmp.ne.s32.totalorder %s34, %s35
      %p46 = scmp.eq.s32.totalorder %s26, 0
      %p47 = por %p45, %p46
      %p48 = scmp.ne.s32.totalorder %s34, %s35
      %p49 = scmp.eq.s32.totalorder %s27, 3
      %p50 = por %p48, %p49
      %p52 = scmp.ne.s32.totalorder %s35, %s51
      %p53 = scmp.eq.s32.totalorder %s27, 0
      %p54 = por %p52, %p53
      %s56 = sadd.s32 %s55, 1
      %p59 = scmp.eq.s32.totalorder %s21, 3
      %p60 = scmp.ne.s32.totalorder %s55, %s57
      %p61 = scmp.eq.s32.totalorder %s21, 0
      %p62 = por %p60, %p61
      %p63 = scmp.ne.s32.totalorder %s55, %s57
      %p64 = scmp.eq.s32.totalorder %s26, 3
      %p65 = por %p63, %p64
      %p66 = scmp.ne.s32.totalorder %s57, %s58
      %p67 = scmp.eq.s32.totalorder %s26, 0
      %p68 = por %p66, %p67
      %p69 = scmp.ne.s32.totalorder %s57, %s58
      %p70 = scmp.eq.s32.totalorder %s27, 3
      %p71 = por %p69, %p70
      %p73 = scmp.ne.s32.totalorder %s58, %s72
      %p74 = scmp.eq.s32.totalorder %s27, 0
      %p75 = por %p73, %p74
      %s77 = sadd.s32 %s76, 1
      %p80 = scmp.eq.s32.totalorder %s21, 3
      %p81 = scmp.ne.s32.totalorder %s76, %s78
      %p82 = scmp.eq.s32.totalorder %s21, 0
      %p83 = por %p81, %p82
      %p84 = scmp.ne.s32.totalorder %s76, %s78
      %p85 = scmp.eq.s32.totalorder %s26, 3
      %p86 = por %p84, %p85
      %p87 = scmp.ne.s32.totalorder %s78, %s79
      %p88 = scmp.eq.s32.totalorder %s26, 0
      %p89 = por %p87, %p88
      %p90 = scmp.ne.s32.totalorder %s78, %s79
      %p91 = scmp.eq.s32.totalorder %s27, 3
      %p92 = por %p90, %p91
      %p94 = scmp.ne.s32.totalorder %s79, %s93
      %p95 = scmp.eq.s32.totalorder %s27, 0
      %p96 = por %p94, %p95
      %s98 = sadd.s32 %s97, 1
      %p101 = scmp.eq.s32.totalorder %s21, 3
      %p102 = scmp.ne.s32.totalorder %s97, %s99
      %p103 = scmp.eq.s32.totalorder %s21, 0
      %p104 = por %p102, %p103
      %p105 = scmp.ne.s32.totalorder %s97, %s99
      %p106 = scmp.eq.s32.totalorder %s26, 3
      %p107 = por %p105, %p106
      %p108 = scmp.ne.s32.totalorder %s99, %s100
      %p109 = scmp.eq.s32.totalorder %s26, 0
      %p110 = por %p108, %p109
      %p111 = scmp.ne.s32.totalorder %s99, %s100
      %p112 = scmp.eq.s32.totalorder %s27, 3
      %p113 = por %p111, %p112
      %p115 = scmp.ne.s32.totalorder %s100, %s114
      %p116 = scmp.eq.s32.totalorder %s27, 0
      %p117 = por %p115, %p116
      %s119 = sadd.s32 %s118, 1
      %p122 = scmp.eq.s32.totalorder %s21, 3
      %p123 = scmp.ne.s32.totalorder %s118, %s120
      %p124 = scmp.eq.s32.totalorder %s21, 0
      %p125 = por %p123, %p124
      %p126 = scmp.ne.s32.totalorder %s118, %s120
      %p127 = scmp.eq.s32.totalorder %s26, 3
      %p128 = por %p126, %p127
      %p129 = scmp.ne.s32.totalorder %s120, %s121
      %p130 = scmp.eq.s32.totalorder %s26, 0
      %p131 = por %p129, %p130
      %p132 = scmp.ne.s32.totalorder %s120, %s121
      %p133 = scmp.eq.s32.totalorder %s27, 3
      %p134 = por %p132, %p133
      %p136 = scmp.ne.s32.totalorder %s121, %s135
      %p137 = scmp.eq.s32.totalorder %s27, 0
      %p138 = por %p136, %p137
      %s140 = sadd.s32 %s139, 1
      %p143 = scmp.eq.s32.totalorder %s21, 3
      %p144 = scmp.ne.s32.totalorder %s139, %s141
      %p145 = scmp.eq.s32.totalorder %s21, 0
      %p146 = por %p144, %p145
      %p147 = scmp.ne.s32.totalorder %s139, %s141
      %p148 = scmp.eq.s32.totalorder %s26, 3
      %p149 = por %p147, %p148
      %p150 = scmp.ne.s32.totalorder %s141, %s142
      %p151 = scmp.eq.s32.totalorder %s26, 0
      %p152 = por %p150, %p151
      %p153 = scmp.ne.s32.totalorder %s141, %s142
      %p154 = scmp.eq.s32.totalorder %s27, 3
      %p155 = por %p153, %p154
      %p157 = scmp.ne.s32.totalorder %s142, %s156
      %p158 = scmp.eq.s32.totalorder %s27, 0
      %p159 = por %p157, %p158
      %s160 = ssub.s32 %s21, %s28
      %p161 = scmp.eq.s32.totalorder %s160, 0
      %s163 = sadd.s32 %s162, 1
      %s164 = scalar_select %p161, %s162, %s163
      %p167 = pneg %p161
      %p168 = scmp.eq.s32.totalorder %s21, 3
      %p169 = por %p167, %p168
      %p170 = scmp.ne.s32.totalorder %s162, %s165
      %p171 = scmp.eq.s32.totalorder %s21, 0
      %p172 = por %p170, %p171
      %p173 = scmp.ne.s32.totalorder %s162, %s165
      %p174 = scmp.eq.s32.totalorder %s26, 3
      %p175 = por %p173, %p174
      %p176 = scmp.ne.s32.totalorder %s165, %s166
      %p177 = scmp.eq.s32.totalorder %s26, 0
      %p178 = por %p176, %p177
      %p179 = scmp.ne.s32.totalorder %s165, %s166
      %p180 = scmp.eq.s32.totalorder %s27, 3
      %p181 = por %p179, %p180
      %p183 = scmp.ne.s32.totalorder %s166, %s182
      %p184 = scmp.eq.s32.totalorder %s27, 0
      %p185 = por %p183, %p184
      %s186 = ssub.s32 %s21, %s28
      %p187 = scmp.eq.s32.totalorder %s186, 0
      %s189 = sadd.s32 %s188, 1
      %s190 = scalar_select %p187, %s188, %s189
      %p193 = pneg %p187
      %p194 = scmp.eq.s32.totalorder %s21, 3
      %p195 = por %p193, %p194
      %p196 = scmp.ne.s32.totalorder %s188, %s191
      %p197 = scmp.eq.s32.totalorder %s21, 0
      %p198 = por %p196, %p197
      %p199 = scmp.ne.s32.totalorder %s188, %s191
      %p200 = scmp.eq.s32.totalorder %s26, 3
      %p201 = por %p199, %p200
      %p202 = scmp.ne.s32.totalorder %s191, %s192
      %p203 = scmp.eq.s32.totalorder %s26, 0
      %p204 = por %p202, %p203
      %p205 = scmp.ne.s32.totalorder %s191, %s192
      %p206 = scmp.eq.s32.totalorder %s27, 3
      %p207 = por %p205, %p206
      %p209 = scmp.ne.s32.totalorder %s192, %s208
      %p210 = scmp.eq.s32.totalorder %s27, 0
      %p211 = por %p209, %p210
      %s212 = ssub.s32 %s21, %s28
      %p213 = scmp.eq.s32.totalorder %s212, 0
      %s215 = sadd.s32 %s214, 1
      %s216 = scalar_select %p213, %s214, %s215
      %p219 = pneg %p213
      %p220 = scmp.eq.s32.totalorder %s21, 3
      %p221 = por %p219, %p220
      %p222 = scmp.ne.s32.totalorder %s214, %s217
      %p223 = scmp.eq.s32.totalorder %s21, 0
      %p224 = por %p222, %p223
      %p225 = scmp.ne.s32.totalorder %s214, %s217
      %p226 = scmp.eq.s32.totalorder %s26, 3
      %p227 = por %p225, %p226
      %p228 = scmp.ne.s32.totalorder %s217, %s218
      %p229 = scmp.eq.s32.totalorder %s26, 0
      %p230 = por %p228, %p229
      %p231 = scmp.ne.s32.totalorder %s217, %s218
      %p232 = scmp.eq.s32.totalorder %s27, 3
      %p233 = por %p231, %p232
      %p235 = scmp.ne.s32.totalorder %s218, %s234
      %p236 = scmp.eq.s32.totalorder %s27, 0
      %p237 = por %p235, %p236
      %s238 = ssub.s32 %s21, %s28
      %p239 = scmp.eq.s32.totalorder %s238, 0
      %s241 = sadd.s32 %s240, 1
      %s242 = scalar_select %p239, %s240, %s241
      %p245 = pneg %p239
      %p246 = scmp.eq.s32.totalorder %s21, 3
      %p247 = por %p245, %p246
      %p248 = scmp.ne.s32.totalorder %s240, %s243
      %p249 = scmp.eq.s32.totalorder %s21, 0
      %p250 = por %p248, %p249
      %p251 = scmp.ne.s32.totalorder %s240, %s243
      %p252 = scmp.eq.s32.totalorder %s26, 3
      %p253 = por %p251, %p252
      %p254 = scmp.ne.s32.totalorder %s243, %s244
      %p255 = scmp.eq.s32.totalorder %s26, 0
      %p256 = por %p254, %p255
      %p257 = scmp.ne.s32.totalorder %s243, %s244
      %p258 = scmp.eq.s32.totalorder %s27, 3
      %p259 = por %p257, %p258
      %p261 = scmp.ne.s32.totalorder %s244, %s260
      %p262 = scmp.eq.s32.totalorder %s27, 0
      %p263 = por %p261, %p262
      %s264 = ssub.s32 %s21, %s28
      %p265 = scmp.eq.s32.totalorder %s264, 0
      %s267 = sadd.s32 %s266, 1
      %s268 = scalar_select %p265, %s266, %s267
      %p271 = pneg %p265
      %p272 = scmp.eq.s32.totalorder %s21, 3
      %p273 = por %p271, %p272
      %p274 = scmp.ne.s32.totalorder %s266, %s269
      %p275 = scmp.eq.s32.totalorder %s21, 0
      %p276 = por %p274, %p275
      %p277 = scmp.ne.s32.totalorder %s266, %s269
      %p278 = scmp.eq.s32.totalorder %s26, 3
      %p279 = por %p277, %p278
      %p280 = scmp.ne.s32.totalorder %s269, %s270
      %p281 = scmp.eq.s32.totalorder %s26, 0
      %p282 = por %p280, %p281
      %p283 = scmp.ne.s32.totalorder %s269, %s270
      %p284 = scmp.eq.s32.totalorder %s27, 3
      %p285 = por %p283, %p284
      %p287 = scmp.ne.s32.totalorder %s270, %s286
      %p288 = scmp.eq.s32.totalorder %s27, 0
      %p289 = por %p287, %p288
      %s290 = ssub.s32 %s21, %s28
      %p291 = scmp.eq.s32.totalorder %s290, 0
      %s293 = sadd.s32 %s292, 1
      %s294 = scalar_select %p291, %s292, %s293
      %p297 = pneg %p291
      %p298 = scmp.eq.s32.totalorder %s21, 3
      %p299 = por %p297, %p298
      %p300 = scmp.ne.s32.totalorder %s292, %s295
      %p301 = scmp.eq.s32.totalorder %s21, 0
      %p302 = por %p300, %p301
      %p303 = scmp.ne.s32.totalorder %s292, %s295
      %p304 = scmp.eq.s32.totalorder %s26, 3
      %p305 = por %p303, %p304
      %p306 = scmp.ne.s32.totalorder %s295, %s296
      %p307 = scmp.eq.s32.totalorder %s26, 0
      %p308 = por %p306, %p307
      %p309 = scmp.ne.s32.totalorder %s295, %s296
      %p310 = scmp.eq.s32.totalorder %s27, 3
      %p311 = por %p309, %p310
      %p313 = scmp.ne.s32.totalorder %s296, %s312
      %p314 = scmp.eq.s32.totalorder %s27, 0
      %p315 = por %p313, %p314
      %p316 = scmp.le.s32.totalorder 1, %s21
      %p317 = scmp.lt.s32.totalorder %s21, 5
      %p318 = pnand %p316, %p317
      %p319 = pneg %p318
      // Predicated region
      $region9: #{tpu_custom_call.1} parent=5 // pred_check
        _
      $region10: #{tpu_custom_call.1} parent=5 // pred_check_branch
        %321 = sbr.rel (%p318) target = $region12
      $region11: #{tpu_custom_call.1} parent=5 // pred_region
        %s322 = ssub.s32 %s21, 1
        // Predicated region
        $region13: #{tpu_custom_call.1} parent=11 // pred_check
          %p323 = pneg %p68
        $region14: #{tpu_custom_call.1} parent=11 // pred_check_branch
          %325 = sbr.rel (%p323) target = $region16
        $region15: #{tpu_custom_call.1} parent=11 // pred_region
          _
        $region16: #{tpu_custom_call.1} parent=11 // pred_fallthru
          _
        // Predicated region
        $region17: #{tpu_custom_call.1} parent=11 // pred_check
          %p326 = pneg %p89
        $region18: #{tpu_custom_call.1} parent=11 // pred_check_branch
          %328 = sbr.rel (%p326) target = $region20
        $region19: #{tpu_custom_call.1} parent=11 // pred_region
          _
        $region20: #{tpu_custom_call.1} parent=11 // pred_fallthru
          _
        // Predicated region
        $region21: #{tpu_custom_call.1} parent=11 // pred_check
          %p329 = pneg %p110
        $region22: #{tpu_custom_call.1} parent=11 // pred_check_branch
          %331 = sbr.rel (%p329) target = $region24
        $region23: #{tpu_custom_call.1} parent=11 // pred_region
          _
        $region24: #{tpu_custom_call.1} parent=11 // pred_fallthru
          _
        // Predicated region
        $region25: #{tpu_custom_call.1} parent=11 // pred_check
          %p332 = pneg %p131
        $region26: #{tpu_custom_call.1} parent=11 // pred_check_branch
          %334 = sbr.rel (%p332) target = $region28
        $region27: #{tpu_custom_call.1} parent=11 // pred_region
          _
        $region28: #{tpu_custom_call.1} parent=11 // pred_fallthru
          _
        // Predicated region
        $region29: #{tpu_custom_call.1} parent=11 // pred_check
          %p335 = pneg %p152
        $region30: #{tpu_custom_call.1} parent=11 // pred_check_branch
          %337 = sbr.rel (%p335) target = $region32
        $region31: #{tpu_custom_call.1} parent=11 // pred_region
          _
        $region32: #{tpu_custom_call.1} parent=11 // pred_fallthru
          _
      $region12: #{tpu_custom_call.1} parent=5 // pred_fallthru
        _
      %p338 = scmp.lt.s32.totalorder %s21, 4
      // Predicated region
      $region33: #{tpu_custom_call.1} parent=5 // pred_check
        %p339 = pneg %p338
      $region34: #{tpu_custom_call.1} parent=5 // pred_check_branch
        %341 = sbr.rel (%p339) target = $region36
      $region35: #{tpu_custom_call.1} parent=5 // pred_region
        // Predicated region
        $region37: #{tpu_custom_call.1} parent=35 // pred_check
          %p342 = pneg %p41
        $region38: #{tpu_custom_call.1} parent=35 // pred_check_branch
          %344 = sbr.rel (%p342) target = $region40
        $region39: #{tpu_custom_call.1} parent=35 // pred_region
          %p345 = scmp.lt.s32.totalorder %s21, 3
          %s346 = scalar_select %p345, %s21, 3
          %s347 = smul.addr %s346, 8
          %s348 = scalar_lea.vmem %s0, %s347
        $region40: #{tpu_custom_call.1} parent=35 // pred_fallthru
          _
        // Predicated region
        $region41: #{tpu_custom_call.1} parent=35 // pred_check
          %p349 = pneg %p172
        $region42: #{tpu_custom_call.1} parent=35 // pred_check_branch
          %351 = sbr.rel (%p349) target = $region44
        $region43: #{tpu_custom_call.1} parent=35 // pred_region
          %p352 = scmp.lt.s32.totalorder %s21, 3
          %s353 = scalar_select %p352, %s21, 3
          %s354 = smul.addr %s353, 8
          %s355 = scalar_lea.vmem %s6, %s354
        $region44: #{tpu_custom_call.1} parent=35 // pred_fallthru
          _
      $region36: #{tpu_custom_call.1} parent=5 // pred_fallthru
        _
      %p356 = scmp.le.s32.totalorder 1, %s21
      %p357 = scmp.lt.s32.totalorder %s21, 5
      %p358 = pnand %p356, %p357
      %p359 = pneg %p358
      // Predicated region
      $region45: #{tpu_custom_call.1} parent=5 // pred_check
        _
      $region46: #{tpu_custom_call.1} parent=5 // pred_check_branch
        %361 = sbr.rel (%p358) target = $region48
      $region47: #{tpu_custom_call.1} parent=5 // pred_region
        %s362 = ssub.s32 %s21, 1
        %p363 = scmp.lt.s32.totalorder %s26, 3
        %s364 = scalar_select %p363, %s26, 3
        %s365 = smul.addr %s364, 8
        %s366 = scalar_lea.vmem %s0, %s365
        %p367 = pneg %p47
        %p368 = pneg %p44
        %p369 = pneg %p68
        %p370 = pneg %p65
        %p371 = pneg %p89
        %p372 = pneg %p86
        %p373 = pneg %p110
        %p374 = pneg %p107
        %p375 = pneg %p131
        %p376 = pneg %p128
        %p377 = pneg %p152
        %p378 = pneg %p149
        %p379 = scmp.lt.s32.totalorder %s26, 3
        %s380 = scalar_select %p379, %s26, 3
        %s381 = smul.addr %s380, 8
        %s382 = scalar_lea.vmem %s6, %s381
        %p383 = pneg %p178
        %p384 = pneg %p175
        %p385 = pneg %p204
        %p386 = pneg %p201
        %p387 = scmp.lt.s32.totalorder %s26, 3
        %s388 = scalar_select %p387, %s26, 3
        %s389 = smul.addr %s388, 8
        %s390 = scalar_lea.vmem %s7, %s389
        %p391 = pneg %p230
        %p392 = pneg %p227
        %p393 = scmp.lt.s32.totalorder %s26, 3
        %s394 = scalar_select %p393, %s26, 3
        %s395 = smul.addr %s394, 8
        %s396 = scalar_lea.vmem %s8, %s395
        %p397 = pneg %p256
        %p398 = pneg %p253
        %p399 = scmp.lt.s32.totalorder %s26, 3
        %s400 = scalar_select %p399, %s26, 3
        %s401 = smul.addr %s400, 8
        %s402 = scalar_lea.vmem %s9, %s401
        %p403 = pneg %p282
        %p404 = pneg %p279
        %p405 = scmp.lt.s32.totalorder %s26, 3
        %s406 = scalar_select %p405, %s26, 3
        %s407 = smul.addr %s406, 8
        %s408 = scalar_lea.vmem %s10, %s407
        %p409 = pneg %p308
        %p410 = pneg %p305
        %s411 = sand.u32 %s295, 1
        %s412 = scalar_lea.sflag [#allocation3], %s411
        %s413 = sand.u32 %s295, 1
        %s414 = smul.addr %s413, 32
        %s415 = scalar_lea.vmem [#allocation2], %s414
        %p416 = scmp.lt.s32.totalorder %s26, 3
        %s417 = scalar_select %p416, %s26, 3
        %s418 = smul.addr %s417, 8
        %s419 = scalar_lea.vmem %s0, %s418
        %p420 = scmp.lt.s32.totalorder %s26, 3
        %s421 = scalar_select %p420, %s26, 3
        %s422 = smul.addr %s421, 8
        %s423 = scalar_lea.vmem %s6, %s422
        %p424 = scmp.lt.s32.totalorder %s26, 3
        %s425 = scalar_select %p424, %s26, 3
        %s426 = smul.addr %s425, 8
        %s427 = scalar_lea.vmem %s7, %s426
        %p428 = scmp.lt.s32.totalorder %s26, 3
        %s429 = scalar_select %p428, %s26, 3
        %s430 = smul.addr %s429, 8
        %s431 = scalar_lea.vmem %s8, %s430
        %p432 = scmp.lt.s32.totalorder %s26, 3
        %s433 = scalar_select %p432, %s26, 3
        %s434 = smul.addr %s433, 8
        %s435 = scalar_lea.vmem %s9, %s434
        %p436 = scmp.lt.s32.totalorder %s26, 3
        %s437 = scalar_select %p436, %s26, 3
        %s438 = smul.addr %s437, 8
        %s439 = scalar_lea.vmem %s10, %s438
        %v441 = vld [vmem:[%s419] sm:$0xff]
        %v442 = vpack.c.bf16 %v441, %v441
        %v443 = vld [vmem:[%s1] sm:$0xf]
        %v444 = vld [vmem:[%s1 + $0x4] sm:$0xf]
        %v445 = vld [vmem:[%s1 + $0x8] sm:$0xf]
        %v446 = vld [vmem:[%s1 + $0xc] sm:$0xf]
        %v451 = vunpack.c.l.b16 %v443
        %v452 = vunpack.c.l.b16 %v444
        %v453 = vunpack.c.l.b16 %v445
        %v454 = vunpack.c.l.b16 %v446
        %v455 = vpack.c.b16 %v452, %v451
        %v456 = vpack.c.b16 %v454, %v453
        %vm459 = vcmask 261120
        %v461 = vsel %vm459, %v442, 0
        %463 = vmatprep.subr.bf16.mxu0 0
        %464 = vmatpush1.bf16.msra.mxu0 %v455
        %465 = vmatprep.subr.bf16.mxu0 0
        %466 = vmatpush1.bf16.msra.mxu0 %v456
        %467 = vmatprep.subr.bf16.mxu0 0
        %468 = vmatpush1.bf16.msra.mxu0 0
        %469 = vmatprep.subr.bf16.mxu0 0
        %470 = vmatpush1.bf16.msra.mxu0 0
        %471 = vmatprep.subr.bf16.mxu0 0
        %472 = vmatpush1.bf16.msra.mxu0 0
        %473 = vmatprep.subr.bf16.mxu0 0
        %474 = vmatpush1.bf16.msra.mxu0 0
        %475 = vmatprep.subr.bf16.mxu0 0
        %476 = vmatpush1.bf16.msra.mxu0 0
        %477 = vmatprep.subr.bf16.mxu0 0
        %478 = vmatpush1.bf16.msra.mxu0 0
        %479 = vmatprep.subr.bf16.mxu0 0
        %480 = vmatpush1.bf16.msra.mxu0 0
        %481 = vmatprep.subr.bf16.mxu0 0
        %482 = vmatpush1.bf16.msra.mxu0 0
        %483 = vmatprep.subr.bf16.mxu0 0
        %484 = vmatpush1.bf16.msra.mxu0 0
        %485 = vmatprep.subr.bf16.mxu0 0
        %486 = vmatpush1.bf16.msra.mxu0 0
        %487 = vmatprep.subr.bf16.mxu0 0
        %488 = vmatpush1.bf16.msra.mxu0 0
        %489 = vmatprep.subr.bf16.mxu0 0
        %490 = vmatpush1.bf16.msra.mxu0 0
        %491 = vmatprep.subr.bf16.mxu0 0
        %492 = vmatpush1.bf16.msra.mxu0 0
        %493 = vmatprep.subr.bf16.mxu0 0
        %494 = vmatpush1.bf16.msra.mxu0 0
        %495 = vmatprep.mubr.bf16.mxu0 0
        %496 = vmatmul.mubr.bf16.gmra.mrb[0].mxu0 %v461
        %v497 = vpop.f32.mrb[0].mxu0
        %v498 = vadd.f32 0.0, %v497
        %v499 = vpop.f32.mrb[0].mxu0
        %v500 = vpop.f32.mrb[0].mxu0
        %v501 = vpop.f32.mrb[0].mxu0
        %502 = vdwg.mxu0
        %vm503 = vcmask 130048
        %v504 = vsel %vm503, %v498, -inf
        %505 = vmax.xlane.f32.xlu0 %v504
        %v506 = vpop.xlane.xlu0 %505
        %v507 = vsub.f32 %v498, %v506
        %v508 = vmul.f32 %v507, 1.442695
        %v509 = vpow.pop %v508
        %v510 = vsel %vm503, %v509, 0.0
        %511 = vadd.xlane.f32.xlu0 %v510
        %v512 = vpop.xlane.xlu0 %511
        %v513 = vrcp.pop %v512
        %v514 = vmul.f32 %v509, %v513
        %v515 = vadd.f32 %v514, 1e-20
        %v516 = vlog2.pop %v515
        %v517 = vmul.f32 %v516, 0.6931472
        %v518 = vmul.f32 %v514, %v517
        %v519 = vsel %vm503, %v518, 0.0
        %520 = vadd.xlane.f32.xlu0 %v519
        %v521 = vpop.xlane.xlu0 %520
        %v522 = vsub.f32 0.0, %v521
        %vm523 = vcmask 7168
        %524 = vst.msk [vmem:[%s431] sm:$0xff] %vm523, %v522
        %v525 = vld [vmem:[%s2] sm:$0xf]
        %v526 = vld [vmem:[%s2 + $0x4] sm:$0xf]
        %v527 = vld [vmem:[%s2 + $0x8] sm:$0xf]
        %v528 = vld [vmem:[%s2 + $0xc] sm:$0xf]
        %v533 = vunpack.c.l.b16 %v525
        %v534 = vunpack.c.l.b16 %v526
        %v535 = vunpack.c.l.b16 %v527
        %v536 = vunpack.c.l.b16 %v528
        %v537 = vpack.c.b16 %v534, %v533
        %v538 = vpack.c.b16 %v536, %v535
        %541 = vmatprep.subr.bf16.mxu0 0
        %542 = vmatpush1.bf16.msra.mxu0 %v537
        %543 = vmatprep.subr.bf16.mxu0 0
        %544 = vmatpush1.bf16.msra.mxu0 %v538
        %545 = vmatprep.subr.bf16.mxu0 0
        %546 = vmatpush1.bf16.msra.mxu0 0
        %547 = vmatprep.subr.bf16.mxu0 0
        %548 = vmatpush1.bf16.msra.mxu0 0
        %549 = vmatprep.subr.bf16.mxu0 0
        %550 = vmatpush1.bf16.msra.mxu0 0
        %551 = vmatprep.subr.bf16.mxu0 0
        %552 = vmatpush1.bf16.msra.mxu0 0
        %553 = vmatprep.subr.bf16.mxu0 0
        %554 = vmatpush1.bf16.msra.mxu0 0
        %555 = vmatprep.subr.bf16.mxu0 0
        %556 = vmatpush1.bf16.msra.mxu0 0
        %557 = vmatprep.subr.bf16.mxu0 0
        %558 = vmatpush1.bf16.msra.mxu0 0
        %559 = vmatprep.subr.bf16.mxu0 0
        %560 = vmatpush1.bf16.msra.mxu0 0
        %561 = vmatprep.subr.bf16.mxu0 0
        %562 = vmatpush1.bf16.msra.mxu0 0
        %563 = vmatprep.subr.bf16.mxu0 0
        %564 = vmatpush1.bf16.msra.mxu0 0
        %565 = vmatprep.subr.bf16.mxu0 0
        %566 = vmatpush1.bf16.msra.mxu0 0
        %567 = vmatprep.subr.bf16.mxu0 0
        %568 = vmatpush1.bf16.msra.mxu0 0
        %569 = vmatprep.subr.bf16.mxu0 0
        %570 = vmatpush1.bf16.msra.mxu0 0
        %571 = vmatprep.subr.bf16.mxu0 0
        %572 = vmatpush1.bf16.msra.mxu0 0
        %573 = vmatprep.mubr.bf16.mxu0 0
        %574 = vmatmul.mubr.bf16.gmra.mrb[0].mxu0 %v461
        %v575 = vpop.f32.mrb[0].mxu0
        %v576 = vadd.f32 0.0, %v575
        %v577 = vpop.f32.mrb[0].mxu0
        %v578 = vpop.f32.mrb[0].mxu0
        %v579 = vpop.f32.mrb[0].mxu0
        %580 = vdwg.mxu0
        %vm581 = vcmp.gt.f32.partialorder %v576, 0.0
        %v582 = vsel %vm581, 1, 0
        %v583 = vcvt.s32.f32 %v582
        %v584 = vpack.c.bf16 %v583, %v583
        %v585 = vld [vmem:[%s3] sm:$0xff]
        %v586 = vld [vmem:[%s3 + $0x8] sm:$0xff]
        %v587 = vld [vmem:[%s4] sm:$0xf]
        %v589 = vlaneseq
        %v590 = vshrl.u32 %v589, 7
        %v591 = vsub.s32 0, %v590
        %v592 = vrot.slane %v587, %v591
        %v593 = vlaneseq
        %v594 = vshrl.u32 %v593, 7
        %v595 = vsub.s32 1, %v594
        %v596 = vrot.slane %v587, %v595
        %v597 = vlaneseq
        %v598 = vshrl.u32 %v597, 7
        %v599 = vsub.s32 2, %v598
        %v600 = vrot.slane %v587, %v599
        %v601 = vlaneseq
        %v602 = vshrl.u32 %v601, 7
        %v603 = vsub.s32 3, %v602
        %v604 = vrot.slane %v587, %v603
        %v611 = vunpack.c.l.b16 %v585
        %v612 = vunpack.c.h.b16 %v585
        %v613 = vunpack.c.l.b16 %v586
        %v614 = vunpack.c.h.b16 %v586
        %v615 = vpack.c.b16 %v611, %v611
        %v616 = vpack.c.b16 %v612, %v612
        %v617 = vpack.c.b16 %v613, %v613
        %v618 = vpack.c.b16 %v614, %v614
        %vm619 = vcmask 64512
        %v621 = vsel %vm619, %v584, 0
        %vm623 = vcmask 1043456
        %v625 = vsel %vm623, %v615, 0
        %v628 = vsel %vm623, %v616, 0
        %v631 = vsel %vm623, %v617, 0
        %v634 = vsel %vm623, %v618, 0
        %636 = vmatprep.subr.bf16.mxu0 %v628
        %637 = vmatpush1.bf16.msra.mxu0 %v625
        %638 = vmatprep.subr.bf16.mxu0 0
        %639 = vmatpush1.bf16.msra.mxu0 0
        %640 = vmatprep.subr.bf16.mxu0 0
        %641 = vmatpush1.bf16.msra.mxu0 0
        %642 = vmatprep.subr.bf16.mxu0 0
        %643 = vmatpush1.bf16.msra.mxu0 0
        %644 = vmatprep.subr.bf16.mxu0 0
        %645 = vmatpush1.bf16.msra.mxu0 0
        %646 = vmatprep.subr.bf16.mxu0 0
        %647 = vmatpush1.bf16.msra.mxu0 0
        %648 = vmatprep.subr.bf16.mxu0 0
        %649 = vmatpush1.bf16.msra.mxu0 0
        %650 = vmatprep.subr.bf16.mxu0 0
        %651 = vmatpush1.bf16.msra.mxu0 0
        %652 = vmatprep.subr.bf16.mxu0 0
        %653 = vmatpush1.bf16.msra.mxu0 0
        %654 = vmatprep.subr.bf16.mxu0 0
        %655 = vmatpush1.bf16.msra.mxu0 0
        %656 = vmatprep.subr.bf16.mxu0 0
        %657 = vmatpush1.bf16.msra.mxu0 0
        %658 = vmatprep.subr.bf16.mxu0 0
        %659 = vmatpush1.bf16.msra.mxu0 0
        %660 = vmatprep.subr.bf16.mxu0 0
        %661 = vmatpush1.bf16.msra.mxu0 0
        %662 = vmatprep.subr.bf16.mxu0 0
        %663 = vmatpush1.bf16.msra.mxu0 0
        %664 = vmatprep.subr.bf16.mxu0 0
        %665 = vmatpush1.bf16.msra.mxu0 0
        %666 = vmatprep.subr.bf16.mxu0 0
        %667 = vmatpush1.bf16.msra.mxu0 0
        %668 = vmatprep.mubr.bf16.mxu0 0
        %669 = vmatmul.mubr.bf16.gmra.mrb[0].mxu0 %v621
        %v670 = vpop.f32.mrb[0].mxu0
        %v671 = vadd.f32 %v592, %v670
        %v672 = vpop.f32.mrb[0].mxu0
        %v673 = vadd.f32 %v596, %v672
        %v674 = vpop.f32.mrb[0].mxu0
        %v675 = vpop.f32.mrb[0].mxu0
        %676 = vdwg.mxu0
        %677 = vmatprep.subr.bf16.mxu0 %v634
        %678 = vmatpush1.bf16.msra.mxu0 %v631
        %679 = vmatprep.subr.bf16.mxu0 0
        %680 = vmatpush1.bf16.msra.mxu0 0
        %681 = vmatprep.subr.bf16.mxu0 0
        %682 = vmatpush1.bf16.msra.mxu0 0
        %683 = vmatprep.subr.bf16.mxu0 0
        %684 = vmatpush1.bf16.msra.mxu0 0
        %685 = vmatprep.subr.bf16.mxu0 0
        %686 = vmatpush1.bf16.msra.mxu0 0
        %687 = vmatprep.subr.bf16.mxu0 0
        %688 = vmatpush1.bf16.msra.mxu0 0
        %689 = vmatprep.subr.bf16.mxu0 0
        %690 = vmatpush1.bf16.msra.mxu0 0
        %691 = vmatprep.subr.bf16.mxu0 0
        %692 = vmatpush1.bf16.msra.mxu0 0
        %693 = vmatprep.subr.bf16.mxu0 0
        %694 = vmatpush1.bf16.msra.mxu0 0
        %695 = vmatprep.subr.bf16.mxu0 0
        %696 = vmatpush1.bf16.msra.mxu0 0
        %697 = vmatprep.subr.bf16.mxu0 0
        %698 = vmatpush1.bf16.msra.mxu0 0
        %699 = vmatprep.subr.bf16.mxu0 0
        %700 = vmatpush1.bf16.msra.mxu0 0
        %701 = vmatprep.subr.bf16.mxu0 0
        %702 = vmatpush1.bf16.msra.mxu0 0
        %703 = vmatprep.subr.bf16.mxu0 0
        %704 = vmatpush1.bf16.msra.mxu0 0
        %705 = vmatprep.subr.bf16.mxu0 0
        %706 = vmatpush1.bf16.msra.mxu0 0
        %707 = vmatprep.subr.bf16.mxu0 0
        %708 = vmatpush1.bf16.msra.mxu0 0
        %709 = vmatprep.mubr.bf16.mxu0 0
        %710 = vmatmul.mubr.bf16.gmra.mrb[0].mxu0 %v621
        %v711 = vpop.f32.mrb[0].mxu0
        %v712 = vadd.f32 %v600, %v711
        %v713 = vpop.f32.mrb[0].mxu0
        %v714 = vadd.f32 %v604, %v713
        %v715 = vpop.f32.mrb[0].mxu0
        %v716 = vpop.f32.mrb[0].mxu0
        %717 = vdwg.mxu0
        %v718 = vld [vmem:[%s423] sm:$0xff]
        %720 = vrot.lane.b32.xlu0 %v718, 32
        %v721 = vpop.permute.xlu0 %720
        %723 = vrot.lane.b32.xlu0 %v718, 64
        %v724 = vpop.permute.xlu0 %723
        %726 = vrot.lane.b32.xlu0 %v718, 96
        %v727 = vpop.permute.xlu0 %726
        %v729 = vsel %vm459, %v718, %v721
        %vm730 = vcmask 523264
        %v731 = vsel %vm730, %v729, %v724
        %vm732 = vcmask 785408
        %v733 = vsel %vm732, %v731, %v727
        %v734 = vsub.f32 %v671, %v733
        %v735 = vsub.f32 %v673, %v733
        %v736 = vsub.f32 %v712, %v733
        %v737 = vsub.f32 %v714, %v733
        %v738 = vmul.f32 %v734, %v734
        %v739 = vmul.f32 %v735, %v735
        %v740 = vmul.f32 %v736, %v736
        %v741 = vmul.f32 %v737, %v737
        %v742 = vld [vmem:[%s5] sm:$0xff]
        %v743 = vld [vmem:[%s5 + $0x8] sm:$0xff]
        %v744 = vld [vmem:[%s5 + $0x10] sm:$0xff]
        %v745 = vld [vmem:[%s5 + $0x18] sm:$0xff]
        %v746 = vld [vmem:[%s5 + $0x20] sm:$0xff]
        %v747 = vld [vmem:[%s5 + $0x28] sm:$0xff]
        %v748 = vld [vmem:[%s5 + $0x30] sm:$0xff]
        %v749 = vld [vmem:[%s5 + $0x38] sm:$0xff]
        %v750 = vld [vmem:[%s5 + $0x40] sm:$0xff]
        %v751 = vld [vmem:[%s5 + $0x48] sm:$0xff]
        %v752 = vld [vmem:[%s5 + $0x50] sm:$0xff]
        %v753 = vld [vmem:[%s5 + $0x58] sm:$0xff]
        %v754 = vld [vmem:[%s5 + $0x60] sm:$0xff]
        %v755 = vld [vmem:[%s5 + $0x68] sm:$0xff]
        %v756 = vld [vmem:[%s5 + $0x70] sm:$0xff]
        %v757 = vld [vmem:[%s5 + $0x78] sm:$0xff]
        %v758 = vld [vmem:[%s5 + $0x80] sm:$0xff]
        %v759 = vld [vmem:[%s5 + $0x88] sm:$0xff]
        %v760 = vld [vmem:[%s5 + $0x90] sm:$0xff]
        %v761 = vld [vmem:[%s5 + $0x98] sm:$0xff]
        %v762 = vld [vmem:[%s5 + $0xa0] sm:$0xff]
        %v763 = vld [vmem:[%s5 + $0xa8] sm:$0xff]
        %v764 = vld [vmem:[%s5 + $0xb0] sm:$0xff]
        %v765 = vld [vmem:[%s5 + $0xb8] sm:$0xff]
        %v766 = vld [vmem:[%s5 + $0xc0] sm:$0xff]
        %v767 = vld [vmem:[%s5 + $0xc8] sm:$0xff]
        %v768 = vld [vmem:[%s5 + $0xd0] sm:$0xff]
        %v769 = vld [vmem:[%s5 + $0xd8] sm:$0xff]
        %v770 = vld [vmem:[%s5 + $0xe0] sm:$0xff]
        %v771 = vld [vmem:[%s5 + $0xe8] sm:$0xff]
        %v772 = vld [vmem:[%s5 + $0xf0] sm:$0xff]
        %v773 = vld [vmem:[%s5 + $0xf8] sm:$0xff]
        %v774 = vld [vmem:[%s5 + $0x100] sm:$0xff]
        %v775 = vld [vmem:[%s5 + $0x108] sm:$0xff]
        %v776 = vld [vmem:[%s5 + $0x110] sm:$0xff]
        %v777 = vld [vmem:[%s5 + $0x118] sm:$0xff]
        %v778 = vld [vmem:[%s5 + $0x120] sm:$0xff]
        %v779 = vld [vmem:[%s5 + $0x128] sm:$0xff]
        %v780 = vld [vmem:[%s5 + $0x130] sm:$0xff]
        %v781 = vld [vmem:[%s5 + $0x138] sm:$0xff]
        %v782 = vld [vmem:[%s5 + $0x140] sm:$0xff]
        %v783 = vld [vmem:[%s5 + $0x148] sm:$0xff]
        %v784 = vld [vmem:[%s5 + $0x150] sm:$0xff]
        %v785 = vld [vmem:[%s5 + $0x158] sm:$0xff]
        %v786 = vld [vmem:[%s5 + $0x160] sm:$0xff]
        %v787 = vld [vmem:[%s5 + $0x168] sm:$0xff]
        %v788 = vld [vmem:[%s5 + $0x170] sm:$0xff]
        %v789 = vld [vmem:[%s5 + $0x178] sm:$0xff]
        %v790 = vld [vmem:[%s5 + $0x180] sm:$0xff]
        %v791 = vld [vmem:[%s5 + $0x188] sm:$0xff]
        %v792 = vld [vmem:[%s5 + $0x190] sm:$0xff]
        %v793 = vld [vmem:[%s5 + $0x198] sm:$0xff]
        %v794 = vld [vmem:[%s5 + $0x1a0] sm:$0xff]
        %v795 = vld [vmem:[%s5 + $0x1a8] sm:$0xff]
        %v796 = vld [vmem:[%s5 + $0x1b0] sm:$0xff]
        %v797 = vld [vmem:[%s5 + $0x1b8] sm:$0xff]
        %v798 = vld [vmem:[%s5 + $0x1c0] sm:$0xff]
        %v799 = vld [vmem:[%s5 + $0x1c8] sm:$0xff]
        %v800 = vld [vmem:[%s5 + $0x1d0] sm:$0xff]
        %v801 = vld [vmem:[%s5 + $0x1d8] sm:$0xff]
        %v802 = vld [vmem:[%s5 + $0x1e0] sm:$0xff]
        %v803 = vld [vmem:[%s5 + $0x1e8] sm:$0xff]
        %v804 = vld [vmem:[%s5 + $0x1f0] sm:$0xff]
        %v805 = vld [vmem:[%s5 + $0x1f8] sm:$0xff]
        %806 = vmatprep.subr.mxu0 0.0
        %807 = vmatpush1.msra.mxu0 %v742
        %808 = vmatprep.subr.mxu0 0.0
        %809 = vmatpush1.msra.mxu0 %v743
        %810 = vmatprep.subr.mxu0 0.0
        %811 = vmatpush1.msra.mxu0 %v744
        %812 = vmatprep.subr.mxu0 0.0
        %813 = vmatpush1.msra.mxu0 %v745
        %814 = vmatprep.subr.mxu0 0.0
        %815 = vmatpush1.msra.mxu0 %v746
        %816 = vmatprep.subr.mxu0 0.0
        %817 = vmatpush1.msra.mxu0 %v747
        %818 = vmatprep.subr.mxu0 0.0
        %819 = vmatpush1.msra.mxu0 %v748
        %820 = vmatprep.subr.mxu0 0.0
        %821 = vmatpush1.msra.mxu0 %v749
        %822 = vmatprep.subr.mxu0 0.0
        %823 = vmatpush1.msra.mxu0 %v750
        %824 = vmatprep.subr.mxu0 0.0
        %825 = vmatpush1.msra.mxu0 %v751
        %826 = vmatprep.subr.mxu0 0.0
        %827 = vmatpush1.msra.mxu0 %v752
        %828 = vmatprep.subr.mxu0 0.0
        %829 = vmatpush1.msra.mxu0 %v753
        %830 = vmatprep.subr.mxu0 0.0
        %831 = vmatpush1.msra.mxu0 %v754
        %832 = vmatprep.subr.mxu0 0.0
        %833 = vmatpush1.msra.mxu0 %v755
        %834 = vmatprep.subr.mxu0 0.0
        %835 = vmatpush1.msra.mxu0 %v756
        %836 = vmatprep.subr.mxu0 0.0
        %837 = vmatpush1.msra.mxu0 %v757
        %838 = vmatprep.subr.mxu0 0.0
        %839 = vmatpush1.msra.mxu0 %v758
        %840 = vmatprep.subr.mxu0 0.0
        %841 = vmatpush1.msra.mxu0 %v759
        %842 = vmatprep.subr.mxu0 0.0
        %843 = vmatpush1.msra.mxu0 %v760
        %844 = vmatprep.subr.mxu0 0.0
        %845 = vmatpush1.msra.mxu0 %v761
        %846 = vmatprep.subr.mxu0 0.0
        %847 = vmatpush1.msra.mxu0 %v762
        %848 = vmatprep.subr.mxu0 0.0
        %849 = vmatpush1.msra.mxu0 %v763
        %850 = vmatprep.subr.mxu0 0.0
        %851 = vmatpush1.msra.mxu0 %v764
        %852 = vmatprep.subr.mxu0 0.0
        %853 = vmatpush1.msra.mxu0 %v765
        %854 = vmatprep.subr.mxu0 0.0
        %855 = vmatpush1.msra.mxu0 %v766
        %856 = vmatprep.subr.mxu0 0.0
        %857 = vmatpush1.msra.mxu0 %v767
        %858 = vmatprep.subr.mxu0 0.0
        %859 = vmatpush1.msra.mxu0 %v768
        %860 = vmatprep.subr.mxu0 0.0
        %861 = vmatpush1.msra.mxu0 %v769
        %862 = vmatprep.subr.mxu0 0.0
        %863 = vmatpush1.msra.mxu0 %v770
        %864 = vmatprep.subr.mxu0 0.0
        %865 = vmatpush1.msra.mxu0 %v771
        %866 = vmatprep.subr.mxu0 0.0
        %867 = vmatpush1.msra.mxu0 %v772
        %868 = vmatprep.subr.mxu0 0.0
        %869 = vmatpush1.msra.mxu0 %v773
        %870 = vmatprep.mubr.f32.mxu0 %v739
        %871 = vmatmul.mubr.f32.gmra.mrb[0].mxu0 %v738
        %v872 = vpop.f32.mrb[0].mxu0
        %v873 = vadd.f32 0.0, %v872
        %v874 = vpop.f32.mrb[0].mxu0
        %875 = vdwg.mxu0
        %876 = vmatprep.subr.mxu0 0.0
        %877 = vmatpush1.msra.mxu0 %v774
        %878 = vmatprep.subr.mxu0 0.0
        %879 = vmatpush1.msra.mxu0 %v775
        %880 = vmatprep.subr.mxu0 0.0
        %881 = vmatpush1.msra.mxu0 %v776
        %882 = vmatprep.subr.mxu0 0.0
        %883 = vmatpush1.msra.mxu0 %v777
        %884 = vmatprep.subr.mxu0 0.0
        %885 = vmatpush1.msra.mxu0 %v778
        %886 = vmatprep.subr.mxu0 0.0
        %887 = vmatpush1.msra.mxu0 %v779
        %888 = vmatprep.subr.mxu0 0.0
        %889 = vmatpush1.msra.mxu0 %v780
        %890 = vmatprep.subr.mxu0 0.0
        %891 = vmatpush1.msra.mxu0 %v781
        %892 = vmatprep.subr.mxu0 0.0
        %893 = vmatpush1.msra.mxu0 %v782
        %894 = vmatprep.subr.mxu0 0.0
        %895 = vmatpush1.msra.mxu0 %v783
        %896 = vmatprep.subr.mxu0 0.0
        %897 = vmatpush1.msra.mxu0 %v784
        %898 = vmatprep.subr.mxu0 0.0
        %899 = vmatpush1.msra.mxu0 %v785
        %900 = vmatprep.subr.mxu0 0.0
        %901 = vmatpush1.msra.mxu0 %v786
        %902 = vmatprep.subr.mxu0 0.0
        %903 = vmatpush1.msra.mxu0 %v787
        %904 = vmatprep.subr.mxu0 0.0
        %905 = vmatpush1.msra.mxu0 %v788
        %906 = vmatprep.subr.mxu0 0.0
        %907 = vmatpush1.msra.mxu0 %v789
        %908 = vmatprep.subr.mxu0 0.0
        %909 = vmatpush1.msra.mxu0 %v790
        %910 = vmatprep.subr.mxu0 0.0
        %911 = vmatpush1.msra.mxu0 %v791
        %912 = vmatprep.subr.mxu0 0.0
        %913 = vmatpush1.msra.mxu0 %v792
        %914 = vmatprep.subr.mxu0 0.0
        %915 = vmatpush1.msra.mxu0 %v793
        %916 = vmatprep.subr.mxu0 0.0
        %917 = vmatpush1.msra.mxu0 %v794
        %918 = vmatprep.subr.mxu0 0.0
        %919 = vmatpush1.msra.mxu0 %v795
        %920 = vmatprep.subr.mxu0 0.0
        %921 = vmatpush1.msra.mxu0 %v796
        %922 = vmatprep.subr.mxu0 0.0
        %923 = vmatpush1.msra.mxu0 %v797
        %924 = vmatprep.subr.mxu0 0.0
        %925 = vmatpush1.msra.mxu0 %v798
        %926 = vmatprep.subr.mxu0 0.0
        %927 = vmatpush1.msra.mxu0 %v799
        %928 = vmatprep.subr.mxu0 0.0
        %929 = vmatpush1.msra.mxu0 %v800
        %930 = vmatprep.subr.mxu0 0.0
        %931 = vmatpush1.msra.mxu0 %v801
        %932 = vmatprep.subr.mxu0 0.0
        %933 = vmatpush1.msra.mxu0 %v802
        %934 = vmatprep.subr.mxu0 0.0
        %935 = vmatpush1.msra.mxu0 %v803
        %936 = vmatprep.subr.mxu0 0.0
        %937 = vmatpush1.msra.mxu0 %v804
        %938 = vmatprep.subr.mxu0 0.0
        %939 = vmatpush1.msra.mxu0 %v805
        %940 = vmatprep.mubr.f32.mxu0 %v741
        %941 = vmatmul.mubr.f32.gmra.mrb[0].mxu0 %v740
        %v942 = vpop.f32.mrb[0].mxu0
        %v943 = vadd.f32 %v873, %v942
        %v944 = vpop.f32.mrb[0].mxu0
        %945 = vdwg.mxu0
        %v946 = vmul.f32 %v514, %v943
        %v947 = vsel %vm503, %v946, 0.0
        %948 = vadd.xlane.f32.xlu0 %v947
        %v949 = vpop.xlane.xlu0 %948
        %950 = vst.msk [vmem:[%s427] sm:$0xff] %vm523, %v949
        %951 = vst.msk [vmem:[%s435] sm:$0xff] %vm503, %v514
        %952 = vst.msk [vmem:[%s439] sm:$0xff] %vm503, %v943
        %953 = vst [vmem:[%s415] sm:$0xff] %v671
        %954 = vst [vmem:[%s415 + $0x8] sm:$0xff] %v673
        %955 = vst [vmem:[%s415 + $0x10] sm:$0xff] %v712
        %956 = vst [vmem:[%s415 + $0x18] sm:$0xff] %v714
        %p957 = scmp.lt.s32.totalorder %s26, 3
        %s958 = scalar_select %p957, %s26, 3
        %s959 = smul.addr %s958, 8
        %s960 = scalar_lea.vmem %s7, %s959
        %p961 = scmp.lt.s32.totalorder %s26, 3
        %s962 = scalar_select %p961, %s26, 3
        %s963 = smul.addr %s962, 8
        %s964 = scalar_lea.vmem %s8, %s963
        %p965 = scmp.lt.s32.totalorder %s26, 3
        %s966 = scalar_select %p965, %s26, 3
        %s967 = smul.addr %s966, 8
        %s968 = scalar_lea.vmem %s9, %s967
        %p969 = scmp.lt.s32.totalorder %s26, 3
        %s970 = scalar_select %p969, %s26, 3
        %s971 = smul.addr %s970, 8
        %s972 = scalar_lea.vmem %s10, %s971
        %s973 = sand.u32 %s295, 1
        %s974 = scalar_lea.sflag [#allocation3], %s973
        %s975 = sand.u32 %s295, 1
        %s976 = smul.addr %s975, 32
        %s977 = scalar_lea.vmem [#allocation2], %s976
        // Predicated region
        $region49: #{tpu_custom_call.1} parent=47 // pred_check
          %p978 = pneg %p201
        $region50: #{tpu_custom_call.1} parent=47 // pred_check_branch
          %980 = sbr.rel (%p978) target = $region52
        $region51: #{tpu_custom_call.1} parent=47 // pred_region
          _
        $region52: #{tpu_custom_call.1} parent=47 // pred_fallthru
          _
        // Predicated region
        $region53: #{tpu_custom_call.1} parent=47 // pred_check
          %p981 = pneg %p227
        $region54: #{tpu_custom_call.1} parent=47 // pred_check_branch
          %983 = sbr.rel (%p981) target = $region56
        $region55: #{tpu_custom_call.1} parent=47 // pred_region
          _
        $region56: #{tpu_custom_call.1} parent=47 // pred_fallthru
          _
        // Predicated region
        $region57: #{tpu_custom_call.1} parent=47 // pred_check
          %p984 = pneg %p253
        $region58: #{tpu_custom_call.1} parent=47 // pred_check_branch
          %986 = sbr.rel (%p984) target = $region60
        $region59: #{tpu_custom_call.1} parent=47 // pred_region
          _
        $region60: #{tpu_custom_call.1} parent=47 // pred_fallthru
          _
        // Predicated region
        $region61: #{tpu_custom_call.1} parent=47 // pred_check
          %p987 = pneg %p279
        $region62: #{tpu_custom_call.1} parent=47 // pred_check_branch
          %989 = sbr.rel (%p987) target = $region64
        $region63: #{tpu_custom_call.1} parent=47 // pred_region
          _
        $region64: #{tpu_custom_call.1} parent=47 // pred_fallthru
          _
        // Predicated region
        $region65: #{tpu_custom_call.1} parent=47 // pred_check
          %p990 = pneg %p305
        $region66: #{tpu_custom_call.1} parent=47 // pred_check_branch
          %992 = sbr.rel (%p990) target = $region68
        $region67: #{tpu_custom_call.1} parent=47 // pred_region
          %s994 = ssub.s32 512, 512
          %995 = vsyncadd %s974, %s994
          %s996 = smul.addr %s26, 4
          %s997 = smul.addr %s996, 128
          %s998 = scalar_lea.hbm %s11, %s997
          %s1000 = sshll.u32 %s977, 4
          %s1001 = int_to_ptr.vmem [resolvable:$true] %s1000
          %1003 = dma.vmem_to_hbm [thread:$0]  %s1001, 512, %s998, %s974
        $region68: #{tpu_custom_call.1} parent=47 // pred_fallthru
          _
      $region48: #{tpu_custom_call.1} parent=5 // pred_fallthru
        _
      %p1004 = scmp.le.s32.totalorder 2, %s21
      // Predicated region
      $region69: #{tpu_custom_call.1} parent=5 // pred_check
        %p1005 = pneg %p1004
      $region70: #{tpu_custom_call.1} parent=5 // pred_check_branch
        %1007 = sbr.rel (%p1005) target = $region72
      $region71: #{tpu_custom_call.1} parent=5 // pred_region
        %s1008 = ssub.s32 %s21, 2
        // Predicated region
        $region73: #{tpu_custom_call.1} parent=71 // pred_check
          %p1009 = pneg %p207
        $region74: #{tpu_custom_call.1} parent=71 // pred_check_branch
          %1011 = sbr.rel (%p1009) target = $region76
        $region75: #{tpu_custom_call.1} parent=71 // pred_region
          %p1012 = scmp.lt.s32.totalorder %s27, 3
          %s1013 = scalar_select %p1012, %s27, 3
          %s1014 = smul.addr %s1013, 8
          %s1015 = scalar_lea.vmem %s7, %s1014
        $region76: #{tpu_custom_call.1} parent=71 // pred_fallthru
          _
        // Predicated region
        $region77: #{tpu_custom_call.1} parent=71 // pred_check
          %p1016 = pneg %p233
        $region78: #{tpu_custom_call.1} parent=71 // pred_check_branch
          %1018 = sbr.rel (%p1016) target = $region80
        $region79: #{tpu_custom_call.1} parent=71 // pred_region
          %p1019 = scmp.lt.s32.totalorder %s27, 3
          %s1020 = scalar_select %p1019, %s27, 3
          %s1021 = smul.addr %s1020, 8
          %s1022 = scalar_lea.vmem %s8, %s1021
        $region80: #{tpu_custom_call.1} parent=71 // pred_fallthru
          _
        // Predicated region
        $region81: #{tpu_custom_call.1} parent=71 // pred_check
          %p1023 = pneg %p259
        $region82: #{tpu_custom_call.1} parent=71 // pred_check_branch
          %1025 = sbr.rel (%p1023) target = $region84
        $region83: #{tpu_custom_call.1} parent=71 // pred_region
          %p1026 = scmp.lt.s32.totalorder %s27, 3
          %s1027 = scalar_select %p1026, %s27, 3
          %s1028 = smul.addr %s1027, 8
          %s1029 = scalar_lea.vmem %s9, %s1028
        $region84: #{tpu_custom_call.1} parent=71 // pred_fallthru
          _
        // Predicated region
        $region85: #{tpu_custom_call.1} parent=71 // pred_check
          %p1030 = pneg %p285
        $region86: #{tpu_custom_call.1} parent=71 // pred_check_branch
          %1032 = sbr.rel (%p1030) target = $region88
        $region87: #{tpu_custom_call.1} parent=71 // pred_region
          %p1033 = scmp.lt.s32.totalorder %s27, 3
          %s1034 = scalar_select %p1033, %s27, 3
          %s1035 = smul.addr %s1034, 8
          %s1036 = scalar_lea.vmem %s10, %s1035
        $region88: #{tpu_custom_call.1} parent=71 // pred_fallthru
          _
        // Predicated region
        $region89: #{tpu_custom_call.1} parent=71 // pred_check
          %p1037 = pneg %p311
        $region90: #{tpu_custom_call.1} parent=71 // pred_check_branch
          %1039 = sbr.rel (%p1037) target = $region92
        $region91: #{tpu_custom_call.1} parent=71 // pred_region
          %s1040 = sand.u32 %s296, 1
          %s1041 = scalar_lea.sflag [#allocation3], %s1040
          %s1042 = sand.u32 %s296, 1
          %s1043 = smul.addr %s1042, 32
          %s1044 = scalar_lea.vmem [#allocation2], %s1043
          %1045 = dma.done %s1041, 512
        $region92: #{tpu_custom_call.1} parent=71 // pred_fallthru
          _
      $region72: #{tpu_custom_call.1} parent=5 // pred_fallthru
        _
    $region6: #{tpu_custom_call.1} parent=1 // loop_footer
      %s25 = sadd.s32 1, %s21
    $region7: #{tpu_custom_call.1} parent=1 // loop_footer_branch
      %20 = sbr.rel target = $region3
    $region8: #{tpu_custom_call.1} parent=1 // loop_exit
      _
    %1046 = vsyncpa [#allocation3], 1
    %s1047 = scalar_lea.sflag [#allocation3], 1
    %1048 = vsyncpa %s1047, 1

</llo_original>
